<compile_context>
chip_gen: v5e
topology: v5e:2x2
jax: 0.10.0
libtpu: 0.0.40
codegen_flags: <defaults>
</compile_context>

<pallas_src>
import functools

import jax
import jax.numpy as jnp
from jax.experimental import pallas as pl
from jax.experimental.pallas import tpu as pltpu


def _linear2_kernel(x_ref, w1_ref, t1_ref, w2_ref, t2_ref, o_ref, *,
                    compute_dtype):
    # net1: 1x1 conv (BN scale folded into W1, conv bias + BN shift in t1) -> ReLU
    xc = x_ref[...].astype(compute_dtype)                          # (C, TN)
    h1 = jnp.dot(w1_ref[...], xc, preferred_element_type=jnp.float32)  # (Cm, TN)
    h1 = jnp.maximum(h1 + t1_ref[...], 0.0)
    # net2: 1x1 conv (BN folded the same way)
    h2 = jnp.dot(w2_ref[...], h1.astype(compute_dtype),
                 preferred_element_type=jnp.float32)                # (C, TN)
    h2 = h2 + t2_ref[...]
    # residual add (f32) + final ReLU; single extra read of the X tile.
    o_ref[...] = jnp.maximum(h2 + x_ref[...].astype(jnp.float32),
                             0.0).astype(o_ref.dtype)


def _vmem_budget_bytes():
    """Generation-aware scoped-VMEM budget (leave headroom below physical)."""
    try:
        info = pltpu.get_tpu_info()
        phys = int(getattr(info, "vmem_capacity_bytes", 64 << 20))
    except Exception:
        phys = 64 << 20
    if phys >= (128 << 20):      # v5e / v6e
        return 96 << 20
    if phys >= (64 << 20):       # v7x
        return 48 << 20
    return max(phys // 2, 16 << 20)


@functools.partial(
    jax.jit, static_argnames=("tn", "compute_dtype", "single_buffer_consts"))
def linear2layer_forward(x_nchw, w1, s1, t1, w2, s2, t2, *, tn=None,
                         compute_dtype=jnp.bfloat16,
                         single_buffer_consts=True):
    """x_nchw: (B, C, H, W).  w1: (C/2, C), w2: (C, C/2) (conv-weight layout,
    weights-on-the-left).  s*/t* are per-channel folded bias+BN scale/shift,
    shaped (*, 1).  Returns (B, C, H, W)."""
    B, C, H, W = x_nchw.shape
    Cm = w1.shape[0]
    HW = H * W
    x3d = x_nchw.reshape(B, C, HW)         # channels->sublane, spatial->lane

    # Fold BN scale into the weights (exact: relu(s*(W@X)+t) == relu((s*W)@X+t))
    # and pre-cast to the compute dtype so the kernel does no per-step scaling
    # or weight casts.  These are tiny (Cm,C)/(C,Cm) wrapper-side ops.
    w1c = (w1 * s1).astype(compute_dtype)
    w2c = (w2 * s2).astype(compute_dtype)
    t1f = t1.astype(jnp.float32)
    t2f = t2.astype(jnp.float32)

    budget = _vmem_budget_bytes()
    x_isz = x3d.dtype.itemsize
    w_isz = jnp.dtype(compute_dtype).itemsize
    cbuf = 1 if single_buffer_consts else 2

    def vmem_est(t):
        return (2 * C * t * x_isz                    # double-buffered X tiles
                + 2 * C * t * x_isz                  # double-buffered out tiles
                + cbuf * 2 * C * Cm * w_isz          # W1 + W2
                + cbuf * (C + Cm) * 4                # t1 + t2
                + (2 * C + Cm) * t * 4               # f32 X copy + h2 + h1
                + (4 << 20))                         # margin

    if tn is None:
        cap = 8192 if budget >= (96 << 20) else 2048
        cands = ([HW] if HW <= cap else []) + [
            t for t in (8192, 4096, 2048, 1024, 512, 256, 128)
            if t <= min(cap, HW) and HW % t == 0]
        assert cands, "H*W must fit one tile or be divisible by 128"
        tn = next((t for t in cands if vmem_est(t) <= budget), cands[-1])
        # Keep the parallel grid >= 2 steps wide (v7x has 2 TensorCores).
        while (B * (HW // tn) < 2 and tn % 2 == 0
               and (tn // 2) % 128 == 0 and HW % (tn // 2) == 0):
            tn //= 2
    assert HW % tn == 0 and (tn == HW or tn % 128 == 0), \
        "spatial tile must divide H*W and be lane-aligned"

    vmem_limit = int(min(budget, max(vmem_est(tn), 32 << 20)))

    grid = (B, HW // tn)
    x_spec = pl.BlockSpec((None, C, tn), lambda b, j: (b, 0, j))

    def const_spec(shape):
        idx = lambda b, j: (0,) * len(shape)
        if single_buffer_consts and hasattr(pl, "Buffered"):
            try:
                # Constant index_map -> one buffer is enough; frees VMEM
                # headroom (matters most under v7x's 64 MiB).
                return pl.BlockSpec(shape, idx, pipeline_mode=pl.Buffered(1))
            except Exception:
                pass
        return pl.BlockSpec(shape, idx)

    flops = 4 * B * HW * C * Cm
    io_bytes = (2 * B * C * HW * x_isz
                + (w1c.size + w2c.size) * w_isz + (t1f.size + t2f.size) * 4)

    kernel = functools.partial(_linear2_kernel, compute_dtype=compute_dtype)

    out3d = pl.pallas_call(
        kernel,
        out_shape=jax.ShapeDtypeStruct((B, C, HW), x3d.dtype),
        grid_spec=pltpu.PrefetchScalarGridSpec(
            num_scalar_prefetch=0,
            grid=grid,
            in_specs=[
                x_spec,                 # X tile  (C, TN)
                const_spec((Cm, C)),    # W1' = s1*W1   (compute dtype)
                const_spec((Cm, 1)),    # t1
                const_spec((C, Cm)),    # W2' = s2*W2   (compute dtype)
                const_spec((C, 1)),     # t2
            ],
            out_specs=x_spec,
        ),
        compiler_params=pltpu.CompilerParams(
            dimension_semantics=("parallel", "parallel"),
            vmem_limit_bytes=vmem_limit,
        ),
        cost_estimate=pl.CostEstimate(
            flops=flops, transcendentals=0, bytes_accessed=io_bytes),
    )(x3d, w1c, t1f, w2c, t2f)

    return out3d.reshape(B, C, H, W)


def _fold_bn(bias, gamma, beta, mean, var, eps=1e-5):
    """Fold conv bias + eval-mode BatchNorm into per-channel scale/shift,
    shaped (C, 1) so they broadcast over the lane (spatial) dim."""
    scale = gamma / jnp.sqrt(var + eps)
    shift = (bias - mean) * scale + beta
    return scale[:, None], shift[:, None]


if __name__ == "__main__":
    key = jax.random.PRNGKey(0)
    B, C, H, W = 2, 4, 16, 16
    Cm = C // 2

    k = jax.random.split(key, 5)
    x = jax.random.normal(k[0], (B, C, H, W), dtype=jnp.float32)

    # Conv2d(C -> C/2, k=1) weight (PyTorch (C/2, C, 1, 1)) used as (C/2, C).
    w1 = jax.random.normal(k[1], (Cm, C), dtype=jnp.float32) * 0.1
    b1 = jax.random.normal(k[2], (Cm,), dtype=jnp.float32) * 0.1
    w2 = jax.random.normal(k[3], (C, Cm), dtype=jnp.float32) * 0.1
    b2 = jax.random.normal(k[4], (C,), dtype=jnp.float32) * 0.1

    # BatchNorm params at PyTorch defaults (eval mode): gamma=1, beta=0,
    # running_mean=0, running_var=1.
    g1, be1, m1, v1 = (jnp.ones((Cm,)), jnp.zeros((Cm,)),
                       jnp.zeros((Cm,)), jnp.ones((Cm,)))
    g2, be2, m2, v2 = (jnp.ones((C,)), jnp.zeros((C,)),
                       jnp.zeros((C,)), jnp.ones((C,)))

    s1, t1 = _fold_bn(b1, g1, be1, m1, v1)
    s2, t2 = _fold_bn(b2, g2, be2, m2, v2)

    cd = jnp.bfloat16
    try:
        out = jax.block_until_ready(
            linear2layer_forward(x, w1, s1, t1, w2, s2, t2, compute_dtype=cd))
    except Exception:
        # Fall back to default-buffered constants if pipeline_mode=Buffered(1)
        # is not supported by the running JAX / Mosaic.
        out = jax.block_until_ready(
            linear2layer_forward(x, w1, s1, t1, w2, s2, t2, compute_dtype=cd,
                                 single_buffer_consts=False))

    # Pure-JAX reference with matching semantics: BN scales folded into bf16
    # weights, bf16 MXU inputs, f32 accumulation, f32 residual add.
    x3d = x.reshape(B, C, H * W)
    w1c = (w1 * s1).astype(cd)
    w2c = (w2 * s2).astype(cd)
    h1 = jnp.maximum(
        jnp.einsum('mc,bcn->bmn', w1c, x3d.astype(cd),
                   preferred_element_type=jnp.float32) + t1, 0.0)
    h2 = jnp.einsum('cm,bmn->bcn', w2c, h1.astype(cd),
                    preferred_element_type=jnp.float32) + t2
    ref = jnp.maximum(h2 + x3d, 0.0).reshape(B, C, H, W)

    assert jnp.allclose(out, ref, atol=1e-2, rtol=1e-2), "mismatch vs reference"
    print("KERNEL_OK")
</pallas_src>

<mosaic_0001>
module attributes {stable_mosaic.version = 11 : i64} {
  func.func @_linear2_kernel(%arg0: i32, %arg1: i32, %arg2: memref<1x4x256xf32, #tpu.memory_space<vmem>>, %arg3: memref<2x4xbf16, #tpu.memory_space<vmem>>, %arg4: memref<2x1xf32, #tpu.memory_space<vmem>>, %arg5: memref<4x2xbf16, #tpu.memory_space<vmem>>, %arg6: memref<4x1xf32, #tpu.memory_space<vmem>>, %arg7: memref<1x4x256xf32, #tpu.memory_space<vmem>>) attributes {dimension_semantics = [#tpu.dimension_semantics<parallel>, #tpu.dimension_semantics<parallel>], iteration_bounds = array<i64: 2, 1>, scalar_prefetch = 0 : i64, scratch_operands = 0 : i64, tpu.core_type = #tpu.core_type<tc>, window_params = [{transform_indices = @transform_0, window_bounds = array<i64: 1, 4, 256>}, {pipeline_mode = #tpu.pipeline_mode<synchronous>, transform_indices = @transform_1, window_bounds = array<i64: 2, 4>}, {pipeline_mode = #tpu.pipeline_mode<synchronous>, transform_indices = @transform_2, window_bounds = array<i64: 2, 1>}, {pipeline_mode = #tpu.pipeline_mode<synchronous>, transform_indices = @transform_3, window_bounds = array<i64: 4, 2>}, {pipeline_mode = #tpu.pipeline_mode<synchronous>, transform_indices = @transform_4, window_bounds = array<i64: 4, 1>}, {transform_indices = @transform_5, window_bounds = array<i64: 1, 4, 256>}]} {
    %c0 = arith.constant 0 : index
    %c0_0 = arith.constant 0 : index
    %c0_1 = arith.constant 0 : index
    %0 = vector.load %arg2[%c0, %c0_0, %c0_1] : memref<1x4x256xf32, #tpu.memory_space<vmem>>, vector<1x4x256xf32>
    %1 = vector.shape_cast %0 : vector<1x4x256xf32> to vector<4x256xf32>
    %2 = arith.truncf %1 : vector<4x256xf32> to vector<4x256xbf16>
    %c0_2 = arith.constant 0 : index
    %c0_3 = arith.constant 0 : index
    %3 = vector.load %arg3[%c0_2, %c0_3] : memref<2x4xbf16, #tpu.memory_space<vmem>>, vector<2x4xbf16>
    %cst = arith.constant dense<0.000000e+00> : vector<2x256xf32>
    %4 = tpu.matmul %3, %2, %cst {dimension_numbers = #tpu.dot_dimension_numbers<[1], [0], [0], [1], [0, 0, 1, 1], [], []>} : vector<2x4xbf16>, vector<4x256xbf16>, vector<2x256xf32> -> vector<2x256xf32>
    %c0_4 = arith.constant 0 : index
    %c0_5 = arith.constant 0 : index
    %5 = vector.load %arg4[%c0_4, %c0_5] : memref<2x1xf32, #tpu.memory_space<vmem>>, vector<2x1xf32>
    %6 = vector.broadcast %5 : vector<2x1xf32> to vector<2x256xf32>
    %7 = arith.addf %4, %6 : vector<2x256xf32>
    %cst_6 = arith.constant 0.000000e+00 : f32
    %8 = vector.broadcast %cst_6 : f32 to vector<2x256xf32>
    %9 = arith.maximumf %7, %8 : vector<2x256xf32>
    %c0_7 = arith.constant 0 : index
    %c0_8 = arith.constant 0 : index
    %10 = vector.load %arg5[%c0_7, %c0_8] : memref<4x2xbf16, #tpu.memory_space<vmem>>, vector<4x2xbf16>
    %11 = arith.truncf %9 : vector<2x256xf32> to vector<2x256xbf16>
    %cst_9 = arith.constant dense<0.000000e+00> : vector<4x256xf32>
    %12 = tpu.matmul %10, %11, %cst_9 {dimension_numbers = #tpu.dot_dimension_numbers<[1], [0], [0], [1], [0, 0, 1, 1], [], []>} : vector<4x2xbf16>, vector<2x256xbf16>, vector<4x256xf32> -> vector<4x256xf32>
    %c0_10 = arith.constant 0 : index
    %c0_11 = arith.constant 0 : index
    %13 = vector.load %arg6[%c0_10, %c0_11] : memref<4x1xf32, #tpu.memory_space<vmem>>, vector<4x1xf32>
    %14 = vector.broadcast %13 : vector<4x1xf32> to vector<4x256xf32>
    %15 = arith.addf %12, %14 : vector<4x256xf32>
    %c0_12 = arith.constant 0 : index
    %c0_13 = arith.constant 0 : index
    %c0_14 = arith.constant 0 : index
    %16 = vector.load %arg2[%c0_12, %c0_13, %c0_14] : memref<1x4x256xf32, #tpu.memory_space<vmem>>, vector<1x4x256xf32>
    %17 = vector.shape_cast %16 : vector<1x4x256xf32> to vector<4x256xf32>
    %18 = arith.addf %15, %17 : vector<4x256xf32>
    %cst_15 = arith.constant 0.000000e+00 : f32
    %19 = vector.broadcast %cst_15 : f32 to vector<4x256xf32>
    %20 = arith.maximumf %18, %19 : vector<4x256xf32>
    %c0_16 = arith.constant 0 : index
    %c0_17 = arith.constant 0 : index
    %c0_18 = arith.constant 0 : index
    %21 = vector.load %arg7[%c0_16, %c0_17, %c0_18] : memref<1x4x256xf32, #tpu.memory_space<vmem>>, vector<1x4x256xf32>
    %22 = vector.shape_cast %21 : vector<1x4x256xf32> to vector<4x256xf32>
    %23 = vector.shape_cast %20 : vector<4x256xf32> to vector<1x4x256xf32>
    tpu.vector_store %arg7[%c0_16, %c0_17, %c0_18], %23 {strides = array<i32>} : memref<1x4x256xf32, #tpu.memory_space<vmem>>, vector<1x4x256xf32>,
    return
  }
  func.func @transform_0(%arg0: i32, %arg1: i32) -> (i32, i32, i32) {
    %c0_i32 = arith.constant 0 : i32
    %c0_i32_0 = arith.constant 0 : i32
    return %arg0, %c0_i32, %arg1 : i32, i32, i32
  }
  func.func @transform_1(%arg0: i32, %arg1: i32) -> (i32, i32) {
    %c0_i32 = arith.constant 0 : i32
    %c0_i32_0 = arith.constant 0 : i32
    %c0_i32_1 = arith.constant 0 : i32
    return %c0_i32, %c0_i32_0 : i32, i32
  }
  func.func @transform_2(%arg0: i32, %arg1: i32) -> (i32, i32) {
    %c0_i32 = arith.constant 0 : i32
    %c0_i32_0 = arith.constant 0 : i32
    %c0_i32_1 = arith.constant 0 : i32
    return %c0_i32, %c0_i32_0 : i32, i32
  }
  func.func @transform_3(%arg0: i32, %arg1: i32) -> (i32, i32) {
    %c0_i32 = arith.constant 0 : i32
    %c0_i32_0 = arith.constant 0 : i32
    %c0_i32_1 = arith.constant 0 : i32
    return %c0_i32, %c0_i32_0 : i32, i32
  }
  func.func @transform_4(%arg0: i32, %arg1: i32) -> (i32, i32) {
    %c0_i32 = arith.constant 0 : i32
    %c0_i32_0 = arith.constant 0 : i32
    %c0_i32_1 = arith.constant 0 : i32
    return %c0_i32, %c0_i32_0 : i32, i32
  }
  func.func @transform_5(%arg0: i32, %arg1: i32) -> (i32, i32, i32) {
    %c0_i32 = arith.constant 0 : i32
    %c0_i32_0 = arith.constant 0 : i32
    return %arg0, %c0_i32, %arg1 : i32, i32, i32
  }
}

module attributes {stable_mosaic.version = 11 : i64} {
  func.func @_linear2_kernel(%arg0: i32, %arg1: i32, %arg2: memref<1x4x256xf32, #tpu.memory_space<vmem>>, %arg3: memref<2x4xbf16, #tpu.memory_space<vmem>>, %arg4: memref<2x1xf32, #tpu.memory_space<vmem>>, %arg5: memref<4x2xbf16, #tpu.memory_space<vmem>>, %arg6: memref<4x1xf32, #tpu.memory_space<vmem>>, %arg7: memref<1x4x256xf32, #tpu.memory_space<vmem>>) attributes {dimension_semantics = [#tpu.dimension_semantics<parallel>, #tpu.dimension_semantics<parallel>], iteration_bounds = array<i64: 2, 1>, scalar_prefetch = 0 : i64, scratch_operands = 0 : i64, tpu.core_type = #tpu.core_type<tc>, window_params = [{transform_indices = @transform_0, window_bounds = array<i64: 1, 4, 256>}, {pipeline_mode = #tpu.pipeline_mode<synchronous>, transform_indices = @transform_1, window_bounds = array<i64: 2, 4>}, {pipeline_mode = #tpu.pipeline_mode<synchronous>, transform_indices = @transform_2, window_bounds = array<i64: 2, 1>}, {pipeline_mode = #tpu.pipeline_mode<synchronous>, transform_indices = @transform_3, window_bounds = array<i64: 4, 2>}, {pipeline_mode = #tpu.pipeline_mode<synchronous>, transform_indices = @transform_4, window_bounds = array<i64: 4, 1>}, {transform_indices = @transform_5, window_bounds = array<i64: 1, 4, 256>}]} {
    %c0 = arith.constant 0 : index
    %c0_0 = arith.constant 0 : index
    %c0_1 = arith.constant 0 : index
    %0 = vector.load %arg2[%c0, %c0_0, %c0_1] : memref<1x4x256xf32, #tpu.memory_space<vmem>>, vector<1x4x256xf32>
    %1 = vector.shape_cast %0 : vector<1x4x256xf32> to vector<4x256xf32>
    %2 = arith.truncf %1 : vector<4x256xf32> to vector<4x256xbf16>
    %c0_2 = arith.constant 0 : index
    %c0_3 = arith.constant 0 : index
    %3 = vector.load %arg3[%c0_2, %c0_3] : memref<2x4xbf16, #tpu.memory_space<vmem>>, vector<2x4xbf16>
    %cst = arith.constant dense<0.000000e+00> : vector<2x256xf32>
    %4 = tpu.matmul %3, %2, %cst {dimension_numbers = #tpu.dot_dimension_numbers<[1], [0], [0], [1], [0, 0, 1, 1], [], []>} : vector<2x4xbf16>, vector<4x256xbf16>, vector<2x256xf32> -> vector<2x256xf32>
    %c0_4 = arith.constant 0 : index
    %c0_5 = arith.constant 0 : index
    %5 = vector.load %arg4[%c0_4, %c0_5] : memref<2x1xf32, #tpu.memory_space<vmem>>, vector<2x1xf32>
    %6 = vector.broadcast %5 : vector<2x1xf32> to vector<2x256xf32>
    %7 = arith.addf %4, %6 : vector<2x256xf32>
    %cst_6 = arith.constant 0.000000e+00 : f32
    %8 = vector.broadcast %cst_6 : f32 to vector<2x256xf32>
    %9 = arith.maximumf %7, %8 : vector<2x256xf32>
    %c0_7 = arith.constant 0 : index
    %c0_8 = arith.constant 0 : index
    %10 = vector.load %arg5[%c0_7, %c0_8] : memref<4x2xbf16, #tpu.memory_space<vmem>>, vector<4x2xbf16>
    %11 = arith.truncf %9 : vector<2x256xf32> to vector<2x256xbf16>
    %cst_9 = arith.constant dense<0.000000e+00> : vector<4x256xf32>
    %12 = tpu.matmul %10, %11, %cst_9 {dimension_numbers = #tpu.dot_dimension_numbers<[1], [0], [0], [1], [0, 0, 1, 1], [], []>} : vector<4x2xbf16>, vector<2x256xbf16>, vector<4x256xf32> -> vector<4x256xf32>
    %c0_10 = arith.constant 0 : index
    %c0_11 = arith.constant 0 : index
    %13 = vector.load %arg6[%c0_10, %c0_11] : memref<4x1xf32, #tpu.memory_space<vmem>>, vector<4x1xf32>
    %14 = vector.broadcast %13 : vector<4x1xf32> to vector<4x256xf32>
    %15 = arith.addf %12, %14 : vector<4x256xf32>
    %c0_12 = arith.constant 0 : index
    %c0_13 = arith.constant 0 : index
    %c0_14 = arith.constant 0 : index
    %16 = vector.load %arg2[%c0_12, %c0_13, %c0_14] : memref<1x4x256xf32, #tpu.memory_space<vmem>>, vector<1x4x256xf32>
    %17 = vector.shape_cast %16 : vector<1x4x256xf32> to vector<4x256xf32>
    %18 = arith.addf %15, %17 : vector<4x256xf32>
    %cst_15 = arith.constant 0.000000e+00 : f32
    %19 = vector.broadcast %cst_15 : f32 to vector<4x256xf32>
    %20 = arith.maximumf %18, %19 : vector<4x256xf32>
    %c0_16 = arith.constant 0 : index
    %c0_17 = arith.constant 0 : index
    %c0_18 = arith.constant 0 : index
    %21 = vector.load %arg7[%c0_16, %c0_17, %c0_18] : memref<1x4x256xf32, #tpu.memory_space<vmem>>, vector<1x4x256xf32>
    %22 = vector.shape_cast %21 : vector<1x4x256xf32> to vector<4x256xf32>
    %23 = vector.shape_cast %20 : vector<4x256xf32> to vector<1x4x256xf32>
    tpu.vector_store %arg7[%c0_16, %c0_17, %c0_18], %23 {strides = array<i32>} : memref<1x4x256xf32, #tpu.memory_space<vmem>>, vector<1x4x256xf32>,
    return
  }
  func.func @transform_0(%arg0: i32, %arg1: i32) -> (i32, i32, i32) {
    %c0_i32 = arith.constant 0 : i32
    %c0_i32_0 = arith.constant 0 : i32
    return %arg0, %c0_i32, %arg1 : i32, i32, i32
  }
  func.func @transform_1(%arg0: i32, %arg1: i32) -> (i32, i32) {
    %c0_i32 = arith.constant 0 : i32
    %c0_i32_0 = arith.constant 0 : i32
    %c0_i32_1 = arith.constant 0 : i32
    return %c0_i32, %c0_i32_0 : i32, i32
  }
  func.func @transform_2(%arg0: i32, %arg1: i32) -> (i32, i32) {
    %c0_i32 = arith.constant 0 : i32
    %c0_i32_0 = arith.constant 0 : i32
    %c0_i32_1 = arith.constant 0 : i32
    return %c0_i32, %c0_i32_0 : i32, i32
  }
  func.func @transform_3(%arg0: i32, %arg1: i32) -> (i32, i32) {
    %c0_i32 = arith.constant 0 : i32
    %c0_i32_0 = arith.constant 0 : i32
    %c0_i32_1 = arith.constant 0 : i32
    return %c0_i32, %c0_i32_0 : i32, i32
  }
  func.func @transform_4(%arg0: i32, %arg1: i32) -> (i32, i32) {
    %c0_i32 = arith.constant 0 : i32
    %c0_i32_0 = arith.constant 0 : i32
    %c0_i32_1 = arith.constant 0 : i32
    return %c0_i32, %c0_i32_0 : i32, i32
  }
  func.func @transform_5(%arg0: i32, %arg1: i32) -> (i32, i32, i32) {
    %c0_i32 = arith.constant 0 : i32
    %c0_i32_0 = arith.constant 0 : i32
    return %arg0, %c0_i32, %arg1 : i32, i32, i32
  }
}

</mosaic_0001>

<llo_original>
// kernel: linear2layer_forward.1
$region0: #{linear2layer_forward.1}
  #allocation0 [shape = 'u32[]', space=smem, size = 0x4, offset = 0x4, fixed_abs, tag = 'smem constant byte address 0x4 - core index']
  #allocation1 [shape = 'u32[72,128]{1,0:T(1,128)}', space=vmem, size = 0x9000, scoped, tag = 'internal scratch']
  %s0 = inlined_call_operand.vmem [shape: f32[2,4,256], index: 0, kind: input, shape index: {}]
  %s1 = inlined_call_operand.vmem [shape: bf16[2,4], index: 1, kind: input, shape index: {}]
  %s2 = inlined_call_operand.vmem [shape: f32[2,1], index: 2, kind: input, shape index: {}]
  %s3 = inlined_call_operand.vmem [shape: bf16[4,2], index: 3, kind: input, shape index: {}]
  %s4 = inlined_call_operand.vmem [shape: f32[4,1], index: 4, kind: input, shape index: {}]
  %s5 = inlined_call_operand.vmem [shape: f32[2,4,256], index: 5, kind: output, shape index: {}]
  %s6 = sld [smem:[#allocation0]]
  $region53: #{linear2layer_forward.1} parent=0
    _
  %s8 = ssub.s32 1, %s6
  %s9 = scalar_select 0, %s8, %s6
  loop: start=0, step=1, limit=4
  $region2: #{linear2layer_forward.1} parent=0 // loop_pre_header
    _
  $region3: #{linear2layer_forward.1} parent=0 // loop_header
    %s11 = sphi 0, %s15
    %p12 = scmp.ge.s32.totalorder %s11, 4
    %s18 = sphi 0, %s30
    %s19 = sphi 0, %s26
    %s20 = sphi 0, %s18
    %s21 = sphi 0, %s19
    %s22 = sphi 0, %s20
    %s23 = sphi 0, %s21
    %s35 = sphi 0, %s37
    %s38 = sphi 0, %s35
    %s39 = sphi 0, %s38
    %s55 = sphi 0, %s39
    %s59 = sphi 0, %s59
    %s61 = sphi 0, %s59
    %s62 = sphi 0, %s61
    %s76 = sphi 0, %s62
    %s80 = sphi 0, %s80
    %s82 = sphi 0, %s80
    %s83 = sphi 0, %s82
    %s97 = sphi 0, %s83
    %s101 = sphi 0, %s101
    %s103 = sphi 0, %s101
    %s104 = sphi 0, %s103
    %s118 = sphi 0, %s104
    %s122 = sphi 0, %s122
    %s124 = sphi 0, %s122
    %s125 = sphi 0, %s124
    %s139 = sphi 0, %s125
    %s147 = sphi 0, %s149
    %s150 = sphi 0, %s147
    %s151 = sphi 0, %s150
    %s167 = sphi 0, %s151
  $region4: #{linear2layer_forward.1} parent=0 // loop_header_branch
    %14 = sbr.rel (%p12) target = $region8
  $region5: #{linear2layer_forward.1} parent=0 // loop_body
    %s16 = ssub.s32 %s11, 1
    %s17 = ssub.s32 %s11, 2
    %s24 = sadd.s32 1, %s19
    %p25 = scmp.ge.s32.totalorder %s24, 1
    %s26 = scalar_select %p25, 0, %s24
    %s27 = sadd.s32 1, %s18
    %s28 = scalar_select %p25, %s27, %s18
    %p29 = scmp.ge.s32.totalorder %s28, 2
    %s30 = scalar_select %p29, 0, %s28
    %s31 = ssub.s32 %s18, %s30
    %s32 = ssub.s32 %s19, %s26
    %s33 = sor.u32 %s31, %s32
    %p34 = scmp.eq.s32.totalorder %s33, 0
    %s36 = sadd.s32 %s35, 1
    %s37 = scalar_select %p34, %s35, %s36
    %p40 = pneg %p34
    %p41 = scmp.eq.s32.totalorder %s11, 1
    %p42 = por %p40, %p41
    %p43 = scmp.ne.s32.totalorder %s35, %s38
    %p44 = scmp.eq.s32.totalorder %s11, 0
    %p45 = por %p43, %p44
    %p46 = scmp.ne.s32.totalorder %s35, %s38
    %p47 = scmp.eq.s32.totalorder %s16, 1
    %p48 = por %p46, %p47
    %p49 = scmp.ne.s32.totalorder %s38, %s39
    %p50 = scmp.eq.s32.totalorder %s16, 0
    %p51 = por %p49, %p50
    %p52 = scmp.ne.s32.totalorder %s38, %s39
    %p53 = scmp.eq.s32.totalorder %s17, 1
    %p54 = por %p52, %p53
    %p56 = scmp.ne.s32.totalorder %s39, %s55
    %p57 = scmp.eq.s32.totalorder %s17, 0
    %p58 = por %p56, %p57
    %s60 = sadd.s32 %s59, 1
    %p63 = scmp.eq.s32.totalorder %s11, 1
    %p64 = scmp.ne.s32.totalorder %s59, %s61
    %p65 = scmp.eq.s32.totalorder %s11, 0
    %p66 = por %p64, %p65
    %p67 = scmp.ne.s32.totalorder %s59, %s61
    %p68 = scmp.eq.s32.totalorder %s16, 1
    %p69 = por %p67, %p68
    %p70 = scmp.ne.s32.totalorder %s61, %s62
    %p71 = scmp.eq.s32.totalorder %s16, 0
    %p72 = por %p70, %p71
    %p73 = scmp.ne.s32.totalorder %s61, %s62
    %p74 = scmp.eq.s32.totalorder %s17, 1
    %p75 = por %p73, %p74
    %p77 = scmp.ne.s32.totalorder %s62, %s76
    %p78 = scmp.eq.s32.totalorder %s17, 0
    %p79 = por %p77, %p78
    %s81 = sadd.s32 %s80, 1
    %p84 = scmp.eq.s32.totalorder %s11, 1
    %p85 = scmp.ne.s32.totalorder %s80, %s82
    %p86 = scmp.eq.s32.totalorder %s11, 0
    %p87 = por %p85, %p86
    %p88 = scmp.ne.s32.totalorder %s80, %s82
    %p89 = scmp.eq.s32.totalorder %s16, 1
    %p90 = por %p88, %p89
    %p91 = scmp.ne.s32.totalorder %s82, %s83
    %p92 = scmp.eq.s32.totalorder %s16, 0
    %p93 = por %p91, %p92
    %p94 = scmp.ne.s32.totalorder %s82, %s83
    %p95 = scmp.eq.s32.totalorder %s17, 1
    %p96 = por %p94, %p95
    %p98 = scmp.ne.s32.totalorder %s83, %s97
    %p99 = scmp.eq.s32.totalorder %s17, 0
    %p100 = por %p98, %p99
    %s102 = sadd.s32 %s101, 1
    %p105 = scmp.eq.s32.totalorder %s11, 1
    %p106 = scmp.ne.s32.totalorder %s101, %s103
    %p107 = scmp.eq.s32.totalorder %s11, 0
    %p108 = por %p106, %p107
    %p109 = scmp.ne.s32.totalorder %s101, %s103
    %p110 = scmp.eq.s32.totalorder %s16, 1
    %p111 = por %p109, %p110
    %p112 = scmp.ne.s32.totalorder %s103, %s104
    %p113 = scmp.eq.s32.totalorder %s16, 0
    %p114 = por %p112, %p113
    %p115 = scmp.ne.s32.totalorder %s103, %s104
    %p116 = scmp.eq.s32.totalorder %s17, 1
    %p117 = por %p115, %p116
    %p119 = scmp.ne.s32.totalorder %s104, %s118
    %p120 = scmp.eq.s32.totalorder %s17, 0
    %p121 = por %p119, %p120
    %s123 = sadd.s32 %s122, 1
    %p126 = scmp.eq.s32.totalorder %s11, 1
    %p127 = scmp.ne.s32.totalorder %s122, %s124
    %p128 = scmp.eq.s32.totalorder %s11, 0
    %p129 = por %p127, %p128
    %p130 = scmp.ne.s32.totalorder %s122, %s124
    %p131 = scmp.eq.s32.totalorder %s16, 1
    %p132 = por %p130, %p131
    %p133 = scmp.ne.s32.totalorder %s124, %s125
    %p134 = scmp.eq.s32.totalorder %s16, 0
    %p135 = por %p133, %p134
    %p136 = scmp.ne.s32.totalorder %s124, %s125
    %p137 = scmp.eq.s32.totalorder %s17, 1
    %p138 = por %p136, %p137
    %p140 = scmp.ne.s32.totalorder %s125, %s139
    %p141 = scmp.eq.s32.totalorder %s17, 0
    %p142 = por %p140, %p141
    %s143 = ssub.s32 %s18, %s30
    %s144 = ssub.s32 %s19, %s26
    %s145 = sor.u32 %s143, %s144
    %p146 = scmp.eq.s32.totalorder %s145, 0
    %s148 = sadd.s32 %s147, 1
    %s149 = scalar_select %p146, %s147, %s148
    %p152 = pneg %p146
    %p153 = scmp.eq.s32.totalorder %s11, 1
    %p154 = por %p152, %p153
    %p155 = scmp.ne.s32.totalorder %s147, %s150
    %p156 = scmp.eq.s32.totalorder %s11, 0
    %p157 = por %p155, %p156
    %p158 = scmp.ne.s32.totalorder %s147, %s150
    %p159 = scmp.eq.s32.totalorder %s16, 1
    %p160 = por %p158, %p159
    %p161 = scmp.ne.s32.totalorder %s150, %s151
    %p162 = scmp.eq.s32.totalorder %s16, 0
    %p163 = por %p161, %p162
    %p164 = scmp.ne.s32.totalorder %s150, %s151
    %p165 = scmp.eq.s32.totalorder %s17, 1
    %p166 = por %p164, %p165
    %p168 = scmp.ne.s32.totalorder %s151, %s167
    %p169 = scmp.eq.s32.totalorder %s17, 0
    %p170 = por %p168, %p169
    %p171 = scmp.le.s32.totalorder 1, %s11
    %p172 = scmp.lt.s32.totalorder %s11, 3
    %p173 = pnand %p171, %p172
    %p174 = pneg %p173
    // Predicated region
    $region9: #{linear2layer_forward.1} parent=5 // pred_check
      _
    $region10: #{linear2layer_forward.1} parent=5 // pred_check_branch
      %176 = sbr.rel (%p173) target = $region12
    $region11: #{linear2layer_forward.1} parent=5 // pred_region
      %s177 = ssub.s32 %s11, 1
      // Predicated region
      $region13: #{linear2layer_forward.1} parent=11 // pred_check
        %p178 = pneg %p72
      $region14: #{linear2layer_forward.1} parent=11 // pred_check_branch
        %180 = sbr.rel (%p178) target = $region16
      $region15: #{linear2layer_forward.1} parent=11 // pred_region
        _
      $region16: #{linear2layer_forward.1} parent=11 // pred_fallthru
        _
      // Predicated region
      $region17: #{linear2layer_forward.1} parent=11 // pred_check
        %p181 = pneg %p93
      $region18: #{linear2layer_forward.1} parent=11 // pred_check_branch
        %183 = sbr.rel (%p181) target = $region20
      $region19: #{linear2layer_forward.1} parent=11 // pred_region
        _
      $region20: #{linear2layer_forward.1} parent=11 // pred_fallthru
        _
      // Predicated region
      $region21: #{linear2layer_forward.1} parent=11 // pred_check
        %p184 = pneg %p114
      $region22: #{linear2layer_forward.1} parent=11 // pred_check_branch
        %186 = sbr.rel (%p184) target = $region24
      $region23: #{linear2layer_forward.1} parent=11 // pred_region
        _
      $region24: #{linear2layer_forward.1} parent=11 // pred_fallthru
        _
      // Predicated region
      $region25: #{linear2layer_forward.1} parent=11 // pred_check
        %p187 = pneg %p135
      $region26: #{linear2layer_forward.1} parent=11 // pred_check_branch
        %189 = sbr.rel (%p187) target = $region28
      $region27: #{linear2layer_forward.1} parent=11 // pred_region
        _
      $region28: #{linear2layer_forward.1} parent=11 // pred_fallthru
        _
    $region12: #{linear2layer_forward.1} parent=5 // pred_fallthru
      _
    %p190 = scmp.lt.s32.totalorder %s11, 2
    // Predicated region
    $region29: #{linear2layer_forward.1} parent=5 // pred_check
      %p191 = pneg %p190
    $region30: #{linear2layer_forward.1} parent=5 // pred_check_branch
      %193 = sbr.rel (%p191) target = $region32
    $region31: #{linear2layer_forward.1} parent=5 // pred_region
      // Predicated region
      $region33: #{linear2layer_forward.1} parent=31 // pred_check
        %p194 = pneg %p45
      $region34: #{linear2layer_forward.1} parent=31 // pred_check_branch
        %196 = sbr.rel (%p194) target = $region36
      $region35: #{linear2layer_forward.1} parent=31 // pred_region
        %s197 = smul.u32 2, %s19
        %p198 = scmp.lt.s32.totalorder %s18, 1
        %s199 = scalar_select %p198, %s18, 1
        %p200 = scmp.lt.s32.totalorder %s197, 1
        %s201 = scalar_select %p200, %s197, 1
        %s202 = smul.addr %s199, 2
        %s203 = sadd.s32 %s201, %s202
        %s204 = smul.addr %s203, 4
        %s205 = scalar_lea.vmem %s0, %s204
        %s206 = smul.u32 2, %s19
      $region36: #{linear2layer_forward.1} parent=31 // pred_fallthru
        _
    $region32: #{linear2layer_forward.1} parent=5 // pred_fallthru
      _
    %p207 = scmp.le.s32.totalorder 1, %s11
    %p208 = scmp.lt.s32.totalorder %s11, 3
    %p209 = pnand %p207, %p208
    %p210 = pneg %p209
    // Predicated region
    $region37: #{linear2layer_forward.1} parent=5 // pred_check
      _
    $region38: #{linear2layer_forward.1} parent=5 // pred_check_branch
      %212 = sbr.rel (%p209) target = $region40
    $region39: #{linear2layer_forward.1} parent=5 // pred_region
      %s213 = ssub.s32 %s11, 1
      %s214 = smul.u32 2, %s21
      %p215 = scmp.lt.s32.totalorder %s20, 1
      %s216 = scalar_select %p215, %s20, 1
      %p217 = scmp.lt.s32.totalorder %s214, 1
      %s218 = scalar_select %p217, %s214, 1
      %s219 = smul.addr %s216, 2
      %s220 = sadd.s32 %s218, %s219
      %s221 = smul.addr %s220, 4
      %s222 = scalar_lea.vmem %s0, %s221
      %p223 = pneg %p51
      %p224 = pneg %p48
      %p225 = pneg %p72
      %p226 = pneg %p69
      %p227 = pneg %p93
      %p228 = pneg %p90
      %p229 = pneg %p114
      %p230 = pneg %p111
      %p231 = pneg %p135
      %p232 = pneg %p132
      %p233 = pneg %p163
      %p234 = pneg %p160
      %s235 = smul.u32 2, %s21
      %p236 = scmp.lt.s32.totalorder %s20, 1
      %s237 = scalar_select %p236, %s20, 1
      %p238 = scmp.lt.s32.totalorder %s235, 1
      %s239 = scalar_select %p238, %s235, 1
      %s240 = smul.addr %s237, 2
      %s241 = sadd.s32 %s239, %s240
      %s242 = smul.addr %s241, 4
      %s243 = scalar_lea.vmem %s5, %s242
      %s244 = smul.u32 2, %s21
      %p245 = scmp.lt.s32.totalorder %s20, 1
      %s246 = scalar_select %p245, %s20, 1
      %p247 = scmp.lt.s32.totalorder %s244, 1
      %s248 = scalar_select %p247, %s244, 1
      %s249 = smul.addr %s246, 2
      %s250 = sadd.s32 %s248, %s249
      %s251 = smul.addr %s250, 4
      %s252 = scalar_lea.vmem %s0, %s251
      %s253 = smul.u32 2, %s21
      %s254 = smul.u32 2, %s21
      %p255 = scmp.lt.s32.totalorder %s20, 1
      %s256 = scalar_select %p255, %s20, 1
      %p257 = scmp.lt.s32.totalorder %s254, 1
      %s258 = scalar_select %p257, %s254, 1
      %s259 = smul.addr %s256, 2
      %s260 = sadd.s32 %s258, %s259
      %s261 = smul.addr %s260, 4
      %s262 = scalar_lea.vmem %s5, %s261
      %s263 = smul.u32 2, %s21
      %v265 = vld [vmem:[%s252] sm:$0xff]
      %267 = vst [vmem:[#allocation1] ss:$2 sm:$0xff] %v265
      %v268 = vld.sshfl [vmem:[#allocation1] sm:$0xff pattern:$0x75316420]
      %v269 = vld.sshfl [vmem:[#allocation1 + $0x8] sm:$0xff pattern:$0x75316420]
      %v272 = vpack.c.bf16 %v268, %v268
      %v273 = vpack.c.bf16 %v269, %v269
      %v274 = vld [vmem:[%s1] sm:$0x1]
      %v275 = vld [vmem:[%s2] sm:$0x3]
      %277 = vset.pattern.permute.xlu0 0
      %278 = vperm.xlu0 %277, %v275
      %v279 = vpop.permute.xlu0 %278
      %vm281 = vcmask 31744
      %v283 = vsel %vm281, %v274, 0
      %vm285 = vcmask 1041408
      %v287 = vsel %vm285, %v272, 0
      %v290 = vsel %vm285, %v273, 0
      %292 = vmatpush.bf16.msra.mxu0 0
      %293 = vmatpush.bf16.msra.mxu0 0
      %294 = vmatpush.bf16.msra.mxu0 0
      %295 = vmatpush.bf16.msra.mxu0 0
      %296 = vmatpush.bf16.msra.mxu0 0
      %297 = vmatpush.bf16.msra.mxu0 0
      %298 = vmatpush.bf16.msra.mxu0 0
      %299 = vmatpush.bf16.msra.mxu0 %v287
      %300 = vmatmul.bf16.gmra.mxu0 %v283
      %v301 = vpop.f32.mrf.mxu0
      %v302 = vadd.f32 %v279, %v301
      %v303 = vpop.f32.mrf.mxu0
      %304 = vdwg.mxu0
      %305 = vmatpush.bf16.msra.mxu0 0
      %306 = vmatpush.bf16.msra.mxu0 0
      %307 = vmatpush.bf16.msra.mxu0 0
      %308 = vmatpush.bf16.msra.mxu0 0
      %309 = vmatpush.bf16.msra.mxu0 0
      %310 = vmatpush.bf16.msra.mxu0 0
      %311 = vmatpush.bf16.msra.mxu0 0
      %312 = vmatpush.bf16.msra.mxu0 %v290
      %313 = vmatmul.bf16.gmra.mxu0 %v283
      %v314 = vpop.f32.mrf.mxu0
      %v315 = vadd.f32 %v279, %v314
      %v316 = vpop.f32.mrf.mxu0
      %317 = vdwg.mxu0
      %v318 = vmax.f32 %v302, 0.0
      %v319 = vmax.f32 %v315, 0.0
      %v320 = vld [vmem:[%s3] sm:$0x3]
      %v321 = vpack.c.bf16 %v318, %v318
      %v322 = vpack.c.bf16 %v319, %v319
      %v323 = vld [vmem:[%s4] sm:$0xf]
      %325 = vset.pattern.permute.xlu0 0
      %326 = vperm.xlu0 %325, %v323
      %v327 = vpop.permute.xlu0 %326
      %vm329 = vcmask 15360
      %v331 = vsel %vm329, %v320, 0
      %vm333 = vcmask 1040384
      %v335 = vsel %vm333, %v321, 0
      %v338 = vsel %vm333, %v322, 0
      %340 = vmatpush.bf16.msra.mxu0 0
      %341 = vmatpush.bf16.msra.mxu0 0
      %342 = vmatpush.bf16.msra.mxu0 0
      %343 = vmatpush.bf16.msra.mxu0 0
      %344 = vmatpush.bf16.msra.mxu0 0
      %345 = vmatpush.bf16.msra.mxu0 0
      %346 = vmatpush.bf16.msra.mxu0 0
      %347 = vmatpush.bf16.msra.mxu0 %v335
      %348 = vmatmul.bf16.gmra.mxu0 %v331
      %v349 = vpop.f32.mrf.mxu0
      %v350 = vadd.f32 %v327, %v349
      %v351 = vpop.f32.mrf.mxu0
      %352 = vdwg.mxu0
      %353 = vmatpush.bf16.msra.mxu0 0
      %354 = vmatpush.bf16.msra.mxu0 0
      %355 = vmatpush.bf16.msra.mxu0 0
      %356 = vmatpush.bf16.msra.mxu0 0
      %357 = vmatpush.bf16.msra.mxu0 0
      %358 = vmatpush.bf16.msra.mxu0 0
      %359 = vmatpush.bf16.msra.mxu0 0
      %360 = vmatpush.bf16.msra.mxu0 %v338
      %361 = vmatmul.bf16.gmra.mxu0 %v331
      %v362 = vpop.f32.mrf.mxu0
      %v363 = vadd.f32 %v327, %v362
      %v364 = vpop.f32.mrf.mxu0
      %365 = vdwg.mxu0
      %366 = vst [vmem:[#allocation1] ss:$2 sm:$0xff] %v265
      %v367 = vld.sshfl [vmem:[#allocation1] sm:$0xff pattern:$0x75316420]
      %v368 = vld.sshfl [vmem:[#allocation1 + $0x8] sm:$0xff pattern:$0x75316420]
      %v371 = vadd.f32 %v350, %v367
      %v372 = vadd.f32 %v363, %v368
      %v373 = vmax.f32 %v371, 0.0
      %v374 = vmax.f32 %v372, 0.0
      %v377 = vrot.slane %v374, 4
      %vm378 = vcmask 1043456
      %v379 = vsel %vm378, %v373, %v377
      %381 = vst [vmem:[%s262] sm:$0xff] %v379
      %s382 = smul.u32 2, %s21
      %p383 = scmp.lt.s32.totalorder %s20, 1
      %s384 = scalar_select %p383, %s20, 1
      %p385 = scmp.lt.s32.totalorder %s382, 1
      %s386 = scalar_select %p385, %s382, 1
      %s387 = smul.addr %s384, 2
      %s388 = sadd.s32 %s386, %s387
      %s389 = smul.addr %s388, 4
      %s390 = scalar_lea.vmem %s5, %s389
      // Predicated region
      $region41: #{linear2layer_forward.1} parent=39 // pred_check
        %p391 = pneg %p160
      $region42: #{linear2layer_forward.1} parent=39 // pred_check_branch
        %393 = sbr.rel (%p391) target = $region44
      $region43: #{linear2layer_forward.1} parent=39 // pred_region
        %s394 = smul.u32 2, %s21
      $region44: #{linear2layer_forward.1} parent=39 // pred_fallthru
        _
    $region40: #{linear2layer_forward.1} parent=5 // pred_fallthru
      _
    %p395 = scmp.le.s32.totalorder 2, %s11
    // Predicated region
    $region45: #{linear2layer_forward.1} parent=5 // pred_check
      %p396 = pneg %p395
    $region46: #{linear2layer_forward.1} parent=5 // pred_check_branch
      %398 = sbr.rel (%p396) target = $region48
    $region47: #{linear2layer_forward.1} parent=5 // pred_region
      %s399 = ssub.s32 %s11, 2
      // Predicated region
      $region49: #{linear2layer_forward.1} parent=47 // pred_check
        %p400 = pneg %p166
      $region50: #{linear2layer_forward.1} parent=47 // pred_check_branch
        %402 = sbr.rel (%p400) target = $region52
      $region51: #{linear2layer_forward.1} parent=47 // pred_region
        %s403 = smul.u32 2, %s23
        %p404 = scmp.lt.s32.totalorder %s22, 1
        %s405 = scalar_select %p404, %s22, 1
        %p406 = scmp.lt.s32.totalorder %s403, 1
        %s407 = scalar_select %p406, %s403, 1
        %s408 = smul.addr %s405, 2
        %s409 = sadd.s32 %s407, %s408
        %s410 = smul.addr %s409, 4
        %s411 = scalar_lea.vmem %s5, %s410
      $region52: #{linear2layer_forward.1} parent=47 // pred_fallthru
        _
    $region48: #{linear2layer_forward.1} parent=5 // pred_fallthru
      _
  $region6: #{linear2layer_forward.1} parent=0 // loop_footer
    %s15 = sadd.s32 1, %s11
  $region7: #{linear2layer_forward.1} parent=0 // loop_footer_branch
    %10 = sbr.rel target = $region3
  $region8: #{linear2layer_forward.1} parent=0 // loop_exit
    _

// kernel: linear2layer_forward.1
$region0: #{linear2layer_forward.1}
  #allocation0 [shape = 'u32[]', space=smem, size = 0x4, offset = 0x4, fixed_abs, tag = 'smem constant byte address 0x4 - core index']
  #allocation1 [shape = 'u32[72,128]{1,0:T(1,128)}', space=vmem, size = 0x9000, scoped, tag = 'internal scratch']
  %s0 = inlined_call_operand.vmem [shape: f32[2,4,256], index: 0, kind: input, shape index: {}]
  %s1 = inlined_call_operand.vmem [shape: bf16[2,4], index: 1, kind: input, shape index: {}]
  %s2 = inlined_call_operand.vmem [shape: f32[2,1], index: 2, kind: input, shape index: {}]
  %s3 = inlined_call_operand.vmem [shape: bf16[4,2], index: 3, kind: input, shape index: {}]
  %s4 = inlined_call_operand.vmem [shape: f32[4,1], index: 4, kind: input, shape index: {}]
  %s5 = inlined_call_operand.vmem [shape: f32[2,4,256], index: 5, kind: output, shape index: {}]
  %s6 = sld [smem:[#allocation0]]
  $region53: #{linear2layer_forward.1} parent=0
    _
  %s8 = ssub.s32 1, %s6
  %s9 = scalar_select 0, %s8, %s6
  loop: start=0, step=1, limit=4
  $region2: #{linear2layer_forward.1} parent=0 // loop_pre_header
    _
  $region3: #{linear2layer_forward.1} parent=0 // loop_header
    %s11 = sphi 0, %s15
    %p12 = scmp.ge.s32.totalorder %s11, 4
    %s18 = sphi 0, %s30
    %s19 = sphi 0, %s26
    %s20 = sphi 0, %s18
    %s21 = sphi 0, %s19
    %s22 = sphi 0, %s20
    %s23 = sphi 0, %s21
    %s35 = sphi 0, %s37
    %s38 = sphi 0, %s35
    %s39 = sphi 0, %s38
    %s55 = sphi 0, %s39
    %s59 = sphi 0, %s59
    %s61 = sphi 0, %s59
    %s62 = sphi 0, %s61
    %s76 = sphi 0, %s62
    %s80 = sphi 0, %s80
    %s82 = sphi 0, %s80
    %s83 = sphi 0, %s82
    %s97 = sphi 0, %s83
    %s101 = sphi 0, %s101
    %s103 = sphi 0, %s101
    %s104 = sphi 0, %s103
    %s118 = sphi 0, %s104
    %s122 = sphi 0, %s122
    %s124 = sphi 0, %s122
    %s125 = sphi 0, %s124
    %s139 = sphi 0, %s125
    %s147 = sphi 0, %s149
    %s150 = sphi 0, %s147
    %s151 = sphi 0, %s150
    %s167 = sphi 0, %s151
  $region4: #{linear2layer_forward.1} parent=0 // loop_header_branch
    %14 = sbr.rel (%p12) target = $region8
  $region5: #{linear2layer_forward.1} parent=0 // loop_body
    %s16 = ssub.s32 %s11, 1
    %s17 = ssub.s32 %s11, 2
    %s24 = sadd.s32 1, %s19
    %p25 = scmp.ge.s32.totalorder %s24, 1
    %s26 = scalar_select %p25, 0, %s24
    %s27 = sadd.s32 1, %s18
    %s28 = scalar_select %p25, %s27, %s18
    %p29 = scmp.ge.s32.totalorder %s28, 2
    %s30 = scalar_select %p29, 0, %s28
    %s31 = ssub.s32 %s18, %s30
    %s32 = ssub.s32 %s19, %s26
    %s33 = sor.u32 %s31, %s32
    %p34 = scmp.eq.s32.totalorder %s33, 0
    %s36 = sadd.s32 %s35, 1
    %s37 = scalar_select %p34, %s35, %s36
    %p40 = pneg %p34
    %p41 = scmp.eq.s32.totalorder %s11, 1
    %p42 = por %p40, %p41
    %p43 = scmp.ne.s32.totalorder %s35, %s38
    %p44 = scmp.eq.s32.totalorder %s11, 0
    %p45 = por %p43, %p44
    %p46 = scmp.ne.s32.totalorder %s35, %s38
    %p47 = scmp.eq.s32.totalorder %s16, 1
    %p48 = por %p46, %p47
    %p49 = scmp.ne.s32.totalorder %s38, %s39
    %p50 = scmp.eq.s32.totalorder %s16, 0
    %p51 = por %p49, %p50
    %p52 = scmp.ne.s32.totalorder %s38, %s39
    %p53 = scmp.eq.s32.totalorder %s17, 1
    %p54 = por %p52, %p53
    %p56 = scmp.ne.s32.totalorder %s39, %s55
    %p57 = scmp.eq.s32.totalorder %s17, 0
    %p58 = por %p56, %p57
    %s60 = sadd.s32 %s59, 1
    %p63 = scmp.eq.s32.totalorder %s11, 1
    %p64 = scmp.ne.s32.totalorder %s59, %s61
    %p65 = scmp.eq.s32.totalorder %s11, 0
    %p66 = por %p64, %p65
    %p67 = scmp.ne.s32.totalorder %s59, %s61
    %p68 = scmp.eq.s32.totalorder %s16, 1
    %p69 = por %p67, %p68
    %p70 = scmp.ne.s32.totalorder %s61, %s62
    %p71 = scmp.eq.s32.totalorder %s16, 0
    %p72 = por %p70, %p71
    %p73 = scmp.ne.s32.totalorder %s61, %s62
    %p74 = scmp.eq.s32.totalorder %s17, 1
    %p75 = por %p73, %p74
    %p77 = scmp.ne.s32.totalorder %s62, %s76
    %p78 = scmp.eq.s32.totalorder %s17, 0
    %p79 = por %p77, %p78
    %s81 = sadd.s32 %s80, 1
    %p84 = scmp.eq.s32.totalorder %s11, 1
    %p85 = scmp.ne.s32.totalorder %s80, %s82
    %p86 = scmp.eq.s32.totalorder %s11, 0
    %p87 = por %p85, %p86
    %p88 = scmp.ne.s32.totalorder %s80, %s82
    %p89 = scmp.eq.s32.totalorder %s16, 1
    %p90 = por %p88, %p89
    %p91 = scmp.ne.s32.totalorder %s82, %s83
    %p92 = scmp.eq.s32.totalorder %s16, 0
    %p93 = por %p91, %p92
    %p94 = scmp.ne.s32.totalorder %s82, %s83
    %p95 = scmp.eq.s32.totalorder %s17, 1
    %p96 = por %p94, %p95
    %p98 = scmp.ne.s32.totalorder %s83, %s97
    %p99 = scmp.eq.s32.totalorder %s17, 0
    %p100 = por %p98, %p99
    %s102 = sadd.s32 %s101, 1
    %p105 = scmp.eq.s32.totalorder %s11, 1
    %p106 = scmp.ne.s32.totalorder %s101, %s103
    %p107 = scmp.eq.s32.totalorder %s11, 0
    %p108 = por %p106, %p107
    %p109 = scmp.ne.s32.totalorder %s101, %s103
    %p110 = scmp.eq.s32.totalorder %s16, 1
    %p111 = por %p109, %p110
    %p112 = scmp.ne.s32.totalorder %s103, %s104
    %p113 = scmp.eq.s32.totalorder %s16, 0
    %p114 = por %p112, %p113
    %p115 = scmp.ne.s32.totalorder %s103, %s104
    %p116 = scmp.eq.s32.totalorder %s17, 1
    %p117 = por %p115, %p116
    %p119 = scmp.ne.s32.totalorder %s104, %s118
    %p120 = scmp.eq.s32.totalorder %s17, 0
    %p121 = por %p119, %p120
    %s123 = sadd.s32 %s122, 1
    %p126 = scmp.eq.s32.totalorder %s11, 1
    %p127 = scmp.ne.s32.totalorder %s122, %s124
    %p128 = scmp.eq.s32.totalorder %s11, 0
    %p129 = por %p127, %p128
    %p130 = scmp.ne.s32.totalorder %s122, %s124
    %p131 = scmp.eq.s32.totalorder %s16, 1
    %p132 = por %p130, %p131
    %p133 = scmp.ne.s32.totalorder %s124, %s125
    %p134 = scmp.eq.s32.totalorder %s16, 0
    %p135 = por %p133, %p134
    %p136 = scmp.ne.s32.totalorder %s124, %s125
    %p137 = scmp.eq.s32.totalorder %s17, 1
    %p138 = por %p136, %p137
    %p140 = scmp.ne.s32.totalorder %s125, %s139
    %p141 = scmp.eq.s32.totalorder %s17, 0
    %p142 = por %p140, %p141
    %s143 = ssub.s32 %s18, %s30
    %s144 = ssub.s32 %s19, %s26
    %s145 = sor.u32 %s143, %s144
    %p146 = scmp.eq.s32.totalorder %s145, 0
    %s148 = sadd.s32 %s147, 1
    %s149 = scalar_select %p146, %s147, %s148
    %p152 = pneg %p146
    %p153 = scmp.eq.s32.totalorder %s11, 1
    %p154 = por %p152, %p153
    %p155 = scmp.ne.s32.totalorder %s147, %s150
    %p156 = scmp.eq.s32.totalorder %s11, 0
    %p157 = por %p155, %p156
    %p158 = scmp.ne.s32.totalorder %s147, %s150
    %p159 = scmp.eq.s32.totalorder %s16, 1
    %p160 = por %p158, %p159
    %p161 = scmp.ne.s32.totalorder %s150, %s151
    %p162 = scmp.eq.s32.totalorder %s16, 0
    %p163 = por %p161, %p162
    %p164 = scmp.ne.s32.totalorder %s150, %s151
    %p165 = scmp.eq.s32.totalorder %s17, 1
    %p166 = por %p164, %p165
    %p168 = scmp.ne.s32.totalorder %s151, %s167
    %p169 = scmp.eq.s32.totalorder %s17, 0
    %p170 = por %p168, %p169
    %p171 = scmp.le.s32.totalorder 1, %s11
    %p172 = scmp.lt.s32.totalorder %s11, 3
    %p173 = pnand %p171, %p172
    %p174 = pneg %p173
    // Predicated region
    $region9: #{linear2layer_forward.1} parent=5 // pred_check
      _
    $region10: #{linear2layer_forward.1} parent=5 // pred_check_branch
      %176 = sbr.rel (%p173) target = $region12
    $region11: #{linear2layer_forward.1} parent=5 // pred_region
      %s177 = ssub.s32 %s11, 1
      // Predicated region
      $region13: #{linear2layer_forward.1} parent=11 // pred_check
        %p178 = pneg %p72
      $region14: #{linear2layer_forward.1} parent=11 // pred_check_branch
        %180 = sbr.rel (%p178) target = $region16
      $region15: #{linear2layer_forward.1} parent=11 // pred_region
        _
      $region16: #{linear2layer_forward.1} parent=11 // pred_fallthru
        _
      // Predicated region
      $region17: #{linear2layer_forward.1} parent=11 // pred_check
        %p181 = pneg %p93
      $region18: #{linear2layer_forward.1} parent=11 // pred_check_branch
        %183 = sbr.rel (%p181) target = $region20
      $region19: #{linear2layer_forward.1} parent=11 // pred_region
        _
      $region20: #{linear2layer_forward.1} parent=11 // pred_fallthru
        _
      // Predicated region
      $region21: #{linear2layer_forward.1} parent=11 // pred_check
        %p184 = pneg %p114
      $region22: #{linear2layer_forward.1} parent=11 // pred_check_branch
        %186 = sbr.rel (%p184) target = $region24
      $region23: #{linear2layer_forward.1} parent=11 // pred_region
        _
      $region24: #{linear2layer_forward.1} parent=11 // pred_fallthru
        _
      // Predicated region
      $region25: #{linear2layer_forward.1} parent=11 // pred_check
        %p187 = pneg %p135
      $region26: #{linear2layer_forward.1} parent=11 // pred_check_branch
        %189 = sbr.rel (%p187) target = $region28
      $region27: #{linear2layer_forward.1} parent=11 // pred_region
        _
      $region28: #{linear2layer_forward.1} parent=11 // pred_fallthru
        _
    $region12: #{linear2layer_forward.1} parent=5 // pred_fallthru
      _
    %p190 = scmp.lt.s32.totalorder %s11, 2
    // Predicated region
    $region29: #{linear2layer_forward.1} parent=5 // pred_check
      %p191 = pneg %p190
    $region30: #{linear2layer_forward.1} parent=5 // pred_check_branch
      %193 = sbr.rel (%p191) target = $region32
    $region31: #{linear2layer_forward.1} parent=5 // pred_region
      // Predicated region
      $region33: #{linear2layer_forward.1} parent=31 // pred_check
        %p194 = pneg %p45
      $region34: #{linear2layer_forward.1} parent=31 // pred_check_branch
        %196 = sbr.rel (%p194) target = $region36
      $region35: #{linear2layer_forward.1} parent=31 // pred_region
        %s197 = smul.u32 2, %s19
        %p198 = scmp.lt.s32.totalorder %s18, 1
        %s199 = scalar_select %p198, %s18, 1
        %p200 = scmp.lt.s32.totalorder %s197, 1
        %s201 = scalar_select %p200, %s197, 1
        %s202 = smul.addr %s199, 2
        %s203 = sadd.s32 %s201, %s202
        %s204 = smul.addr %s203, 4
        %s205 = scalar_lea.vmem %s0, %s204
        %s206 = smul.u32 2, %s19
      $region36: #{linear2layer_forward.1} parent=31 // pred_fallthru
        _
    $region32: #{linear2layer_forward.1} parent=5 // pred_fallthru
      _
    %p207 = scmp.le.s32.totalorder 1, %s11
    %p208 = scmp.lt.s32.totalorder %s11, 3
    %p209 = pnand %p207, %p208
    %p210 = pneg %p209
    // Predicated region
    $region37: #{linear2layer_forward.1} parent=5 // pred_check
      _
    $region38: #{linear2layer_forward.1} parent=5 // pred_check_branch
      %212 = sbr.rel (%p209) target = $region40
    $region39: #{linear2layer_forward.1} parent=5 // pred_region
      %s213 = ssub.s32 %s11, 1
      %s214 = smul.u32 2, %s21
      %p215 = scmp.lt.s32.totalorder %s20, 1
      %s216 = scalar_select %p215, %s20, 1
      %p217 = scmp.lt.s32.totalorder %s214, 1
      %s218 = scalar_select %p217, %s214, 1
      %s219 = smul.addr %s216, 2
      %s220 = sadd.s32 %s218, %s219
      %s221 = smul.addr %s220, 4
      %s222 = scalar_lea.vmem %s0, %s221
      %p223 = pneg %p51
      %p224 = pneg %p48
      %p225 = pneg %p72
      %p226 = pneg %p69
      %p227 = pneg %p93
      %p228 = pneg %p90
      %p229 = pneg %p114
      %p230 = pneg %p111
      %p231 = pneg %p135
      %p232 = pneg %p132
      %p233 = pneg %p163
      %p234 = pneg %p160
      %s235 = smul.u32 2, %s21
      %p236 = scmp.lt.s32.totalorder %s20, 1
      %s237 = scalar_select %p236, %s20, 1
      %p238 = scmp.lt.s32.totalorder %s235, 1
      %s239 = scalar_select %p238, %s235, 1
      %s240 = smul.addr %s237, 2
      %s241 = sadd.s32 %s239, %s240
      %s242 = smul.addr %s241, 4
      %s243 = scalar_lea.vmem %s5, %s242
      %s244 = smul.u32 2, %s21
      %p245 = scmp.lt.s32.totalorder %s20, 1
      %s246 = scalar_select %p245, %s20, 1
      %p247 = scmp.lt.s32.totalorder %s244, 1
      %s248 = scalar_select %p247, %s244, 1
      %s249 = smul.addr %s246, 2
      %s250 = sadd.s32 %s248, %s249
      %s251 = smul.addr %s250, 4
      %s252 = scalar_lea.vmem %s0, %s251
      %s253 = smul.u32 2, %s21
      %s254 = smul.u32 2, %s21
      %p255 = scmp.lt.s32.totalorder %s20, 1
      %s256 = scalar_select %p255, %s20, 1
      %p257 = scmp.lt.s32.totalorder %s254, 1
      %s258 = scalar_select %p257, %s254, 1
      %s259 = smul.addr %s256, 2
      %s260 = sadd.s32 %s258, %s259
      %s261 = smul.addr %s260, 4
      %s262 = scalar_lea.vmem %s5, %s261
      %s263 = smul.u32 2, %s21
      %v265 = vld [vmem:[%s252] sm:$0xff]
      %267 = vst [vmem:[#allocation1] ss:$2 sm:$0xff] %v265
      %v268 = vld.sshfl [vmem:[#allocation1] sm:$0xff pattern:$0x75316420]
      %v269 = vld.sshfl [vmem:[#allocation1 + $0x8] sm:$0xff pattern:$0x75316420]
      %v272 = vpack.c.bf16 %v268, %v268
      %v273 = vpack.c.bf16 %v269, %v269
      %v274 = vld [vmem:[%s1] sm:$0x1]
      %v275 = vld [vmem:[%s2] sm:$0x3]
      %277 = vset.pattern.permute.xlu0 0
      %278 = vperm.xlu0 %277, %v275
      %v279 = vpop.permute.xlu0 %278
      %vm281 = vcmask 31744
      %v283 = vsel %vm281, %v274, 0
      %vm285 = vcmask 1041408
      %v287 = vsel %vm285, %v272, 0
      %v290 = vsel %vm285, %v273, 0
      %292 = vmatpush.bf16.msra.mxu0 0
      %293 = vmatpush.bf16.msra.mxu0 0
      %294 = vmatpush.bf16.msra.mxu0 0
      %295 = vmatpush.bf16.msra.mxu0 0
      %296 = vmatpush.bf16.msra.mxu0 0
      %297 = vmatpush.bf16.msra.mxu0 0
      %298 = vmatpush.bf16.msra.mxu0 0
      %299 = vmatpush.bf16.msra.mxu0 %v287
      %300 = vmatmul.bf16.gmra.mxu0 %v283
      %v301 = vpop.f32.mrf.mxu0
      %v302 = vadd.f32 %v279, %v301
      %v303 = vpop.f32.mrf.mxu0
      %304 = vdwg.mxu0
      %305 = vmatpush.bf16.msra.mxu0 0
      %306 = vmatpush.bf16.msra.mxu0 0
      %307 = vmatpush.bf16.msra.mxu0 0
      %308 = vmatpush.bf16.msra.mxu0 0
      %309 = vmatpush.bf16.msra.mxu0 0
      %310 = vmatpush.bf16.msra.mxu0 0
      %311 = vmatpush.bf16.msra.mxu0 0
      %312 = vmatpush.bf16.msra.mxu0 %v290
      %313 = vmatmul.bf16.gmra.mxu0 %v283
      %v314 = vpop.f32.mrf.mxu0
      %v315 = vadd.f32 %v279, %v314
      %v316 = vpop.f32.mrf.mxu0
      %317 = vdwg.mxu0
      %v318 = vmax.f32 %v302, 0.0
      %v319 = vmax.f32 %v315, 0.0
      %v320 = vld [vmem:[%s3] sm:$0x3]
      %v321 = vpack.c.bf16 %v318, %v318
      %v322 = vpack.c.bf16 %v319, %v319
      %v323 = vld [vmem:[%s4] sm:$0xf]
      %325 = vset.pattern.permute.xlu0 0
      %326 = vperm.xlu0 %325, %v323
      %v327 = vpop.permute.xlu0 %326
      %vm329 = vcmask 15360
      %v331 = vsel %vm329, %v320, 0
      %vm333 = vcmask 1040384
      %v335 = vsel %vm333, %v321, 0
      %v338 = vsel %vm333, %v322, 0
      %340 = vmatpush.bf16.msra.mxu0 0
      %341 = vmatpush.bf16.msra.mxu0 0
      %342 = vmatpush.bf16.msra.mxu0 0
      %343 = vmatpush.bf16.msra.mxu0 0
      %344 = vmatpush.bf16.msra.mxu0 0
      %345 = vmatpush.bf16.msra.mxu0 0
      %346 = vmatpush.bf16.msra.mxu0 0
      %347 = vmatpush.bf16.msra.mxu0 %v335
      %348 = vmatmul.bf16.gmra.mxu0 %v331
      %v349 = vpop.f32.mrf.mxu0
      %v350 = vadd.f32 %v327, %v349
      %v351 = vpop.f32.mrf.mxu0
      %352 = vdwg.mxu0
      %353 = vmatpush.bf16.msra.mxu0 0
      %354 = vmatpush.bf16.msra.mxu0 0
      %355 = vmatpush.bf16.msra.mxu0 0
      %356 = vmatpush.bf16.msra.mxu0 0
      %357 = vmatpush.bf16.msra.mxu0 0
      %358 = vmatpush.bf16.msra.mxu0 0
      %359 = vmatpush.bf16.msra.mxu0 0
      %360 = vmatpush.bf16.msra.mxu0 %v338
      %361 = vmatmul.bf16.gmra.mxu0 %v331
      %v362 = vpop.f32.mrf.mxu0
      %v363 = vadd.f32 %v327, %v362
      %v364 = vpop.f32.mrf.mxu0
      %365 = vdwg.mxu0
      %366 = vst [vmem:[#allocation1] ss:$2 sm:$0xff] %v265
      %v367 = vld.sshfl [vmem:[#allocation1] sm:$0xff pattern:$0x75316420]
      %v368 = vld.sshfl [vmem:[#allocation1 + $0x8] sm:$0xff pattern:$0x75316420]
      %v371 = vadd.f32 %v350, %v367
      %v372 = vadd.f32 %v363, %v368
      %v373 = vmax.f32 %v371, 0.0
      %v374 = vmax.f32 %v372, 0.0
      %v377 = vrot.slane %v374, 4
      %vm378 = vcmask 1043456
      %v379 = vsel %vm378, %v373, %v377
      %381 = vst [vmem:[%s262] sm:$0xff] %v379
      %s382 = smul.u32 2, %s21
      %p383 = scmp.lt.s32.totalorder %s20, 1
      %s384 = scalar_select %p383, %s20, 1
      %p385 = scmp.lt.s32.totalorder %s382, 1
      %s386 = scalar_select %p385, %s382, 1
      %s387 = smul.addr %s384, 2
      %s388 = sadd.s32 %s386, %s387
      %s389 = smul.addr %s388, 4
      %s390 = scalar_lea.vmem %s5, %s389
      // Predicated region
      $region41: #{linear2layer_forward.1} parent=39 // pred_check
        %p391 = pneg %p160
      $region42: #{linear2layer_forward.1} parent=39 // pred_check_branch
        %393 = sbr.rel (%p391) target = $region44
      $region43: #{linear2layer_forward.1} parent=39 // pred_region
        %s394 = smul.u32 2, %s21
      $region44: #{linear2layer_forward.1} parent=39 // pred_fallthru
        _
    $region40: #{linear2layer_forward.1} parent=5 // pred_fallthru
      _
    %p395 = scmp.le.s32.totalorder 2, %s11
    // Predicated region
    $region45: #{linear2layer_forward.1} parent=5 // pred_check
      %p396 = pneg %p395
    $region46: #{linear2layer_forward.1} parent=5 // pred_check_branch
      %398 = sbr.rel (%p396) target = $region48
    $region47: #{linear2layer_forward.1} parent=5 // pred_region
      %s399 = ssub.s32 %s11, 2
      // Predicated region
      $region49: #{linear2layer_forward.1} parent=47 // pred_check
        %p400 = pneg %p166
      $region50: #{linear2layer_forward.1} parent=47 // pred_check_branch
        %402 = sbr.rel (%p400) target = $region52
      $region51: #{linear2layer_forward.1} parent=47 // pred_region
        %s403 = smul.u32 2, %s23
        %p404 = scmp.lt.s32.totalorder %s22, 1
        %s405 = scalar_select %p404, %s22, 1
        %p406 = scmp.lt.s32.totalorder %s403, 1
        %s407 = scalar_select %p406, %s403, 1
        %s408 = smul.addr %s405, 2
        %s409 = sadd.s32 %s407, %s408
        %s410 = smul.addr %s409, 4
        %s411 = scalar_lea.vmem %s5, %s410
      $region52: #{linear2layer_forward.1} parent=47 // pred_fallthru
        _
    $region48: #{linear2layer_forward.1} parent=5 // pred_fallthru
      _
  $region6: #{linear2layer_forward.1} parent=0 // loop_footer
    %s15 = sadd.s32 1, %s11
  $region7: #{linear2layer_forward.1} parent=0 // loop_footer_branch
    %10 = sbr.rel target = $region3
  $region8: #{linear2layer_forward.1} parent=0 // loop_exit
    _

</llo_original>
